<compile_context>
chip_gen: v5e
topology: v5e:2x2
jax: 0.10.0
libtpu: 0.0.40
codegen_flags: <defaults>
</compile_context>

<pallas_src>
import functools

import jax
import jax.numpy as jnp
from jax.experimental import pallas as pl
from jax.experimental.pallas import tpu as pltpu


def _round_up(a, b):
    return (a + b - 1) // b * b


def _cdiv(a, b):
    return (a + b - 1) // b


def _vmem_capacity_bytes():
    """Per-chip VMEM capacity; falls back to the smallest generation (v7x, 64 MiB)."""
    try:
        info = pltpu.get_tpu_info()
        cap = getattr(info, "vmem_capacity_bytes", None)
        if cap:
            return int(cap)
    except Exception:
        pass
    return 64 * 1024 * 1024


def ffn_kernel(x_ref, w1_ref, b1_ref, w2_ref, b2_ref, g_ref, beta_ref,
               o_ref, acc_ref, *, d_in, eps, matmul_dtype):
    """One (row-tile, d_hid-chunk) step of Linear->ReLU->Linear->+residual->LayerNorm."""
    k = pl.program_id(1)

    @pl.when(k == 0)
    def _():
        # Fold the residual and b2 into the accumulator init: saves epilogue VPU work
        # and an extra read of the x tile there.
        acc_ref[...] = (x_ref[...].astype(jnp.float32)
                        + b2_ref[...].astype(jnp.float32))

    a = x_ref[...]
    w1 = w1_ref[...]
    w2 = w2_ref[...]
    if matmul_dtype is not None:
        # Optional bf16 MXU path for v6e/v7x (f32 matmul is emulated); f32 accumulation kept.
        a, w1, w2 = a.astype(matmul_dtype), w1.astype(matmul_dtype), w2.astype(matmul_dtype)

    # ---- relu(x @ W1[:, k-chunk] + b1[k-chunk])  (MXU, f32 accumulation) ----
    h = jnp.dot(a, w1, preferred_element_type=jnp.float32)
    h = jnp.maximum(h + b1_ref[...].astype(jnp.float32), 0.0)

    # ---- accumulate h_chunk @ W2[k-chunk, :] into the f32 scratch ----
    acc_ref[...] += jnp.dot(h.astype(w2.dtype), w2,
                            preferred_element_type=jnp.float32)

    # ---- epilogue on the last d_hid chunk: LayerNorm over the true d_in lanes ----
    @pl.when(k == pl.num_programs(1) - 1)
    def _():
        y = acc_ref[...]                    # already contains residual + b2
        d_pad = y.shape[-1]
        if d_pad == d_in:
            mean = jnp.mean(y, axis=-1, keepdims=True)
            yc = y - mean
            var = jnp.mean(yc * yc, axis=-1, keepdims=True)
        else:
            # Padded lanes of y are exactly zero (zero-padded x / W2 cols / b2), but they
            # must be excluded from the LayerNorm statistics over the true d_in lanes.
            lane = jax.lax.broadcasted_iota(jnp.int32, (1, d_pad), 1)
            mask = (lane < d_in).astype(jnp.float32)
            inv_d = 1.0 / d_in
            mean = jnp.sum(y, axis=-1, keepdims=True) * inv_d
            yc = (y - mean) * mask
            var = jnp.sum(yc * yc, axis=-1, keepdims=True) * inv_d
        inv = jax.lax.rsqrt(var + eps)
        o_ref[...] = (yc * inv * g_ref[...].astype(jnp.float32)
                      + beta_ref[...].astype(jnp.float32)).astype(o_ref.dtype)


def positionwise_feed_forward(x, w1, b1, w2, b2, gamma, beta, *,
                              tm=512, tk=1024, eps=1e-6, matmul_dtype=None):
    """x: (B, S, d_in); w1: (d_in, d_hid); w2: (d_hid, d_in). Returns (B, S, d_in)."""
    B, S, d_in = x.shape
    d_hid = w1.shape[1]
    N = B * S

    xbytes = jnp.dtype(x.dtype).itemsize
    wbytes = jnp.dtype(w1.dtype).itemsize
    # sublane packing of the activation dtype (f32:8, bf16:16, int8/fp8:32 rows per tile step)
    sub = {4: 8, 2: 16, 1: 32}.get(xbytes, 8)

    d_in_p = _round_up(d_in, 128)
    d_hid_p = _round_up(d_hid, 128)

    # ---- per-chip VMEM budget ----
    vmem_budget = int(_vmem_capacity_bytes() * 0.85)

    # ---- row tiling: large tm for arithmetic intensity, clamped for small N,
    #      and >=2 row tiles so the "parallel" axis can shard across v7x's 2 TCs ----
    tm = min(tm, _round_up(N, sub))
    if _cdiv(N, tm) < 2 and tm > sub:
        tm = max(sub, _round_up(_cdiv(N, 2), sub))

    def footprint(tm_, tk_):
        # double-buffered x/out/weight blocks + f32 accumulator + f32 hidden temp + vectors
        return (2 * tm_ * d_in_p * xbytes                      # x tile (2 bufs)
                + 2 * tm_ * d_in_p * xbytes                    # out tile (2 bufs)
                + 2 * (d_in_p * tk_ + tk_ * d_in_p) * wbytes   # W1/W2 chunks (2 bufs)
                + tm_ * d_in_p * 4                             # accumulator scratch
                + tm_ * tk_ * 4                                # hidden activation temp
                + 2 * (2 * tk_ + 3 * d_in_p) * 4)              # b1/b2/gamma/beta vectors

    # ---- weights-resident fast path: single k step, W1/W2 DMA'd once (constant block idx) ----
    tm_res = tm
    while (footprint(tm_res, d_hid_p) > vmem_budget
           and tm_res // 2 >= max(256, sub) and (tm_res // 2) % sub == 0):
        tm_res //= 2
    if footprint(tm_res, d_hid_p) <= vmem_budget:
        tm, tk = tm_res, d_hid_p
    else:
        # ---- streaming path: chunk d_hid; shrink tk, then tm, until the budget fits ----
        nk = max(1, _cdiv(d_hid_p, min(tk, d_hid_p)))
        tk = _round_up(_cdiv(d_hid_p, nk), 128)
        while footprint(tm, tk) > vmem_budget and tk > 128:
            nk += 1
            tk = _round_up(_cdiv(d_hid_p, nk), 128)
        while footprint(tm, tk) > vmem_budget and tm > sub:
            tm = max(sub, (tm // 2) // sub * sub)
        d_hid_p = tk * _cdiv(d_hid_p, tk)

    n_rows = _cdiv(N, tm)           # partial last row tile handled by Pallas (no row padding)
    nk = d_hid_p // tk
    grid = (n_rows, nk)

    # ---- lane padding only where needed (weights padded once; activations only when
    #      d_in is not a multiple of 128 — avoids extra HBM pad/slice activation traffic) ----
    x2 = x.reshape(N, d_in)
    if d_in_p != d_in:
        x2 = jnp.pad(x2, ((0, 0), (0, d_in_p - d_in)))
    if d_in_p != d_in or d_hid_p != d_hid:
        w1p = jnp.pad(w1, ((0, d_in_p - d_in), (0, d_hid_p - d_hid)))
        w2p = jnp.pad(w2, ((0, d_hid_p - d_hid), (0, d_in_p - d_in)))
        b1p = jnp.pad(b1, ((0, d_hid_p - d_hid),))
        b2p = jnp.pad(b2, ((0, d_in_p - d_in),))
        gp = jnp.pad(gamma, ((0, d_in_p - d_in),))
        bp = jnp.pad(beta, ((0, d_in_p - d_in),))
    else:
        w1p, w2p, b1p, b2p, gp, bp = w1, w2, b1, b2, gamma, beta
    b1p = b1p.reshape(1, d_hid_p)
    b2p = b2p.reshape(1, d_in_p)
    gp = gp.reshape(1, d_in_p)
    bp = bp.reshape(1, d_in_p)

    need = footprint(tm, tk)
    vmem_limit = int(min(vmem_budget, max(int(need * 1.2), 32 * 1024 * 1024)))

    # Weight HBM traffic: read once when resident (nk == 1), else re-streamed per row tile.
    w_reads = 1 if nk == 1 else n_rows
    cost = pl.CostEstimate(
        flops=4 * N * d_in * d_hid,
        transcendentals=N,                               # one rsqrt per row
        bytes_accessed=(2 * N * d_in * xbytes
                        + w_reads * 2 * d_in_p * d_hid_p * wbytes
                        + (d_hid_p + 3 * d_in_p) * 4),
    )

    kernel = functools.partial(ffn_kernel, d_in=d_in, eps=eps, matmul_dtype=matmul_dtype)

    out = pl.pallas_call(
        kernel,
        out_shape=jax.ShapeDtypeStruct((N, d_in_p), x.dtype),
        grid_spec=pltpu.PrefetchScalarGridSpec(
            num_scalar_prefetch=0,
            grid=grid,
            in_specs=[
                pl.BlockSpec((tm, d_in_p), lambda i, k: (i, 0)),   # x rows (resident over k)
                pl.BlockSpec((d_in_p, tk), lambda i, k: (0, k)),   # W1 chunk (resident if nk==1)
                pl.BlockSpec((1, tk), lambda i, k: (0, k)),        # b1 chunk
                pl.BlockSpec((tk, d_in_p), lambda i, k: (k, 0)),   # W2 chunk (resident if nk==1)
                pl.BlockSpec((1, d_in_p), lambda i, k: (0, 0)),    # b2
                pl.BlockSpec((1, d_in_p), lambda i, k: (0, 0)),    # gamma
                pl.BlockSpec((1, d_in_p), lambda i, k: (0, 0)),    # beta
            ],
            out_specs=pl.BlockSpec((tm, d_in_p), lambda i, k: (i, 0)),
            scratch_shapes=[pltpu.VMEM((tm, d_in_p), jnp.float32)],
        ),
        compiler_params=pltpu.CompilerParams(
            dimension_semantics=("parallel", "arbitrary"),
            vmem_limit_bytes=vmem_limit),
        cost_estimate=cost,
    )(x2, w1p, b1p, w2p, b2p, gp, bp)

    if d_in_p != d_in:
        out = out[:, :d_in]
    return out.reshape(B, S, d_in)


def reference(x, w1, b1, w2, b2, gamma, beta, eps=1e-6):
    h = jnp.maximum(x @ w1 + b1, 0.0)
    y = h @ w2 + b2 + x
    mean = jnp.mean(y, axis=-1, keepdims=True)
    var = jnp.mean((y - mean) ** 2, axis=-1, keepdims=True)
    return (y - mean) * jax.lax.rsqrt(var + eps) * gamma + beta


if __name__ == "__main__":
    key = jax.random.PRNGKey(0)
    B, S, d_in, d_hid = 2, 8, 32, 64

    kx, k1, k2, k3, k4 = jax.random.split(key, 5)
    x = jax.random.normal(kx, (B, S, d_in), dtype=jnp.float32)

    # Deterministic synthetic parameters (shapes follow nn.Linear / nn.LayerNorm).
    w1 = jax.random.normal(k1, (d_in, d_hid), dtype=jnp.float32) * (1.0 / jnp.sqrt(d_in))
    b1 = jax.random.normal(k2, (d_hid,), dtype=jnp.float32) * 0.01
    w2 = jax.random.normal(k3, (d_hid, d_in), dtype=jnp.float32) * (1.0 / jnp.sqrt(d_hid))
    b2 = jax.random.normal(k4, (d_in,), dtype=jnp.float32) * 0.01
    gamma = jnp.ones((d_in,), dtype=jnp.float32)
    beta = jnp.zeros((d_in,), dtype=jnp.float32)

    out = positionwise_feed_forward(x, w1, b1, w2, b2, gamma, beta)
    out = jax.block_until_ready(out)

    ref = reference(x, w1, b1, w2, b2, gamma, beta)
    assert out.shape == (B, S, d_in)
    assert jnp.allclose(out, ref, atol=1e-4, rtol=1e-4), float(jnp.max(jnp.abs(out - ref)))

    # TODO(synk): dropout with p > 0 (training mode) would need pltpu.prng_* in-kernel;
    # the module default p=0.0 makes it the identity here.
    print("KERNEL_OK")
</pallas_src>

<mosaic_0001>
module attributes {stable_mosaic.version = 11 : i64} {
  func.func @ffn_kernel(%arg0: i32, %arg1: i32, %arg2: memref<8x128xf32, #tpu.memory_space<vmem>>, %arg3: memref<128x128xf32, #tpu.memory_space<vmem>>, %arg4: memref<1x128xf32, #tpu.memory_space<vmem>>, %arg5: memref<128x128xf32, #tpu.memory_space<vmem>>, %arg6: memref<1x128xf32, #tpu.memory_space<vmem>>, %arg7: memref<1x128xf32, #tpu.memory_space<vmem>>, %arg8: memref<1x128xf32, #tpu.memory_space<vmem>>, %arg9: memref<8x128xf32, #tpu.memory_space<vmem>>, %arg10: memref<8x128xf32, #tpu.memory_space<vmem>>) attributes {dimension_semantics = [#tpu.dimension_semantics<parallel>, #tpu.dimension_semantics<arbitrary>], iteration_bounds = array<i64: 2, 1>, scalar_prefetch = 0 : i64, scratch_operands = 1 : i64, tpu.core_type = #tpu.core_type<tc>, window_params = [{transform_indices = @transform_0, window_bounds = array<i64: 8, 128>}, {transform_indices = @transform_1, window_bounds = array<i64: 128, 128>}, {transform_indices = @transform_2, window_bounds = array<i64: 1, 128>}, {transform_indices = @transform_3, window_bounds = array<i64: 128, 128>}, {pipeline_mode = #tpu.pipeline_mode<synchronous>, transform_indices = @transform_4, window_bounds = array<i64: 1, 128>}, {pipeline_mode = #tpu.pipeline_mode<synchronous>, transform_indices = @transform_5, window_bounds = array<i64: 1, 128>}, {pipeline_mode = #tpu.pipeline_mode<synchronous>, transform_indices = @transform_6, window_bounds = array<i64: 1, 128>}, {transform_indices = @transform_7, window_bounds = array<i64: 8, 128>}]} {
    %c0_i32 = arith.constant 0 : i32
    %0 = arith.cmpi eq, %arg1, %c0_i32 : i32
    %1 = arith.extui %0 : i1 to i32
    %c0_i32_0 = arith.constant 0 : i32
    %2 = arith.cmpi ne, %1, %c0_i32_0 : i32
    scf.if %2 {
      %c0_16 = arith.constant 0 : index
      %c0_17 = arith.constant 0 : index
      %19 = vector.load %arg2[%c0_16, %c0_17] : memref<8x128xf32, #tpu.memory_space<vmem>>, vector<8x128xf32>
      %c0_18 = arith.constant 0 : index
      %c0_19 = arith.constant 0 : index
      %20 = vector.load %arg6[%c0_18, %c0_19] : memref<1x128xf32, #tpu.memory_space<vmem>>, vector<1x128xf32>
      %21 = vector.broadcast %20 : vector<1x128xf32> to vector<8x128xf32>
      %22 = arith.addf %19, %21 : vector<8x128xf32>
      %c0_20 = arith.constant 0 : index
      %c0_21 = arith.constant 0 : index
      %23 = vector.load %arg10[%c0_20, %c0_21] : memref<8x128xf32, #tpu.memory_space<vmem>>, vector<8x128xf32>
      tpu.vector_store %arg10[%c0_20, %c0_21], %22 {strides = array<i32>} : memref<8x128xf32, #tpu.memory_space<vmem>>, vector<8x128xf32>,
    } else {
    }
    %c0 = arith.constant 0 : index
    %c0_1 = arith.constant 0 : index
    %3 = vector.load %arg2[%c0, %c0_1] : memref<8x128xf32, #tpu.memory_space<vmem>>, vector<8x128xf32>
    %c0_2 = arith.constant 0 : index
    %c0_3 = arith.constant 0 : index
    %4 = vector.load %arg3[%c0_2, %c0_3] : memref<128x128xf32, #tpu.memory_space<vmem>>, vector<128x128xf32>
    %c0_4 = arith.constant 0 : index
    %c0_5 = arith.constant 0 : index
    %5 = vector.load %arg5[%c0_4, %c0_5] : memref<128x128xf32, #tpu.memory_space<vmem>>, vector<128x128xf32>
    %cst = arith.constant dense<0.000000e+00> : vector<8x128xf32>
    %6 = tpu.matmul %3, %4, %cst {dimension_numbers = #tpu.dot_dimension_numbers<[1], [0], [0], [1], [0, 0, 1, 1], [], []>} : vector<8x128xf32>, vector<128x128xf32>, vector<8x128xf32> -> vector<8x128xf32>
    %c0_6 = arith.constant 0 : index
    %c0_7 = arith.constant 0 : index
    %7 = vector.load %arg4[%c0_6, %c0_7] : memref<1x128xf32, #tpu.memory_space<vmem>>, vector<1x128xf32>
    %8 = vector.broadcast %7 : vector<1x128xf32> to vector<8x128xf32>
    %9 = arith.addf %6, %8 : vector<8x128xf32>
    %cst_8 = arith.constant 0.000000e+00 : f32
    %10 = vector.broadcast %cst_8 : f32 to vector<8x128xf32>
    %11 = arith.maximumf %9, %10 : vector<8x128xf32>
    %c0_9 = arith.constant 0 : index
    %c0_10 = arith.constant 0 : index
    %12 = vector.load %arg10[%c0_9, %c0_10] : memref<8x128xf32, #tpu.memory_space<vmem>>, vector<8x128xf32>
    %cst_11 = arith.constant dense<0.000000e+00> : vector<8x128xf32>
    %13 = tpu.matmul %11, %5, %cst_11 {dimension_numbers = #tpu.dot_dimension_numbers<[1], [0], [0], [1], [0, 0, 1, 1], [], []>} : vector<8x128xf32>, vector<128x128xf32>, vector<8x128xf32> -> vector<8x128xf32>
    %14 = arith.addf %12, %13 : vector<8x128xf32>
    %c0_12 = arith.constant 0 : index
    %c0_13 = arith.constant 0 : index
    %15 = vector.load %arg10[%c0_12, %c0_13] : memref<8x128xf32, #tpu.memory_space<vmem>>, vector<8x128xf32>
    tpu.vector_store %arg10[%c0_12, %c0_13], %14 {strides = array<i32>} : memref<8x128xf32, #tpu.memory_space<vmem>>, vector<8x128xf32>,
    %c0_i32_14 = arith.constant 0 : i32
    %16 = arith.cmpi eq, %arg1, %c0_i32_14 : i32
    %17 = arith.extui %16 : i1 to i32
    %c0_i32_15 = arith.constant 0 : i32
    %18 = arith.cmpi ne, %17, %c0_i32_15 : i32
    scf.if %18 {
      %c0_16 = arith.constant 0 : index
      %c0_17 = arith.constant 0 : index
      %19 = vector.load %arg10[%c0_16, %c0_17] : memref<8x128xf32, #tpu.memory_space<vmem>>, vector<8x128xf32>
      %20 = tpu.iota {dimensions = array<i32: 1>} : vector<1x128xi32>
      %c32_i32 = arith.constant 32 : i32
      %21 = vector.broadcast %c32_i32 : i32 to vector<1x128xi32>
      %22 = arith.cmpi slt, %20, %21 : vector<1x128xi32>
      %23 = arith.extui %22 : vector<1x128xi1> to vector<1x128xi32>
      %24 = arith.sitofp %23 : vector<1x128xi32> to vector<1x128xf32>
      %cst_18 = arith.constant dense<0.000000e+00> : vector<8xf32>
      %25 = vector.multi_reduction <add>, %19, %cst_18 [1] : vector<8x128xf32> to vector<8xf32>
      %26 = vector.shape_cast %25 : vector<8xf32> to vector<8x1xf32>
      %cst_19 = arith.constant 3.125000e-02 : f32
      %27 = vector.broadcast %cst_19 : f32 to vector<8x1xf32>
      %28 = arith.mulf %26, %27 : vector<8x1xf32>
      %29 = vector.broadcast %28 : vector<8x1xf32> to vector<8x128xf32>
      %30 = arith.subf %19, %29 : vector<8x128xf32>
      %31 = vector.broadcast %24 : vector<1x128xf32> to vector<8x128xf32>
      %32 = arith.mulf %30, %31 : vector<8x128xf32>
      %33 = arith.mulf %32, %32 : vector<8x128xf32>
      %cst_20 = arith.constant dense<0.000000e+00> : vector<8xf32>
      %34 = vector.multi_reduction <add>, %33, %cst_20 [1] : vector<8x128xf32> to vector<8xf32>
      %35 = vector.shape_cast %34 : vector<8xf32> to vector<8x1xf32>
      %cst_21 = arith.constant 3.125000e-02 : f32
      %36 = vector.broadcast %cst_21 : f32 to vector<8x1xf32>
      %37 = arith.mulf %35, %36 : vector<8x1xf32>
      %cst_22 = arith.constant 9.99999997E-7 : f32
      %38 = vector.broadcast %cst_22 : f32 to vector<8x1xf32>
      %39 = arith.addf %37, %38 : vector<8x1xf32>
      %40 = math.rsqrt %39 : vector<8x1xf32>
      %41 = vector.broadcast %40 : vector<8x1xf32> to vector<8x128xf32>
      %42 = arith.mulf %32, %41 : vector<8x128xf32>
      %c0_23 = arith.constant 0 : index
      %c0_24 = arith.constant 0 : index
      %43 = vector.load %arg7[%c0_23, %c0_24] : memref<1x128xf32, #tpu.memory_space<vmem>>, vector<1x128xf32>
      %44 = vector.broadcast %43 : vector<1x128xf32> to vector<8x128xf32>
      %45 = arith.mulf %42, %44 : vector<8x128xf32>
      %c0_25 = arith.constant 0 : index
      %c0_26 = arith.constant 0 : index
      %46 = vector.load %arg8[%c0_25, %c0_26] : memref<1x128xf32, #tpu.memory_space<vmem>>, vector<1x128xf32>
      %47 = vector.broadcast %46 : vector<1x128xf32> to vector<8x128xf32>
      %48 = arith.addf %45, %47 : vector<8x128xf32>
      %c0_27 = arith.constant 0 : index
      %c0_28 = arith.constant 0 : index
      %49 = vector.load %arg9[%c0_27, %c0_28] : memref<8x128xf32, #tpu.memory_space<vmem>>, vector<8x128xf32>
      tpu.vector_store %arg9[%c0_27, %c0_28], %48 {strides = array<i32>} : memref<8x128xf32, #tpu.memory_space<vmem>>, vector<8x128xf32>,
    } else {
    }
    return
  }
  func.func @transform_0(%arg0: i32, %arg1: i32) -> (i32, i32) {
    %c0_i32 = arith.constant 0 : i32
    %c0_i32_0 = arith.constant 0 : i32
    return %arg0, %c0_i32 : i32, i32
  }
  func.func @transform_1(%arg0: i32, %arg1: i32) -> (i32, i32) {
    %c0_i32 = arith.constant 0 : i32
    %c0_i32_0 = arith.constant 0 : i32
    return %c0_i32, %arg1 : i32, i32
  }
  func.func @transform_2(%arg0: i32, %arg1: i32) -> (i32, i32) {
    %c0_i32 = arith.constant 0 : i32
    %c0_i32_0 = arith.constant 0 : i32
    return %c0_i32, %arg1 : i32, i32
  }
  func.func @transform_3(%arg0: i32, %arg1: i32) -> (i32, i32) {
    %c0_i32 = arith.constant 0 : i32
    %c0_i32_0 = arith.constant 0 : i32
    return %arg1, %c0_i32 : i32, i32
  }
  func.func @transform_4(%arg0: i32, %arg1: i32) -> (i32, i32) {
    %c0_i32 = arith.constant 0 : i32
    %c0_i32_0 = arith.constant 0 : i32
    %c0_i32_1 = arith.constant 0 : i32
    return %c0_i32, %c0_i32_0 : i32, i32
  }
  func.func @transform_5(%arg0: i32, %arg1: i32) -> (i32, i32) {
    %c0_i32 = arith.constant 0 : i32
    %c0_i32_0 = arith.constant 0 : i32
    %c0_i32_1 = arith.constant 0 : i32
    return %c0_i32, %c0_i32_0 : i32, i32
  }
  func.func @transform_6(%arg0: i32, %arg1: i32) -> (i32, i32) {
    %c0_i32 = arith.constant 0 : i32
    %c0_i32_0 = arith.constant 0 : i32
    %c0_i32_1 = arith.constant 0 : i32
    return %c0_i32, %c0_i32_0 : i32, i32
  }
  func.func @transform_7(%arg0: i32, %arg1: i32) -> (i32, i32) {
    %c0_i32 = arith.constant 0 : i32
    %c0_i32_0 = arith.constant 0 : i32
    return %arg0, %c0_i32 : i32, i32
  }
}

</mosaic_0001>

<llo_original>
// kernel: tpu_custom_call.1
$region0: #{tpu_custom_call.1}
  #allocation0 [shape = 'u32[]', space=smem, size = 0x4, offset = 0x4, fixed_abs, tag = 'smem constant byte address 0x4 - core index']
  #allocation1 [shape = 'u32[72,128]{1,0:T(1,128)}', space=vmem, size = 0x9000, scoped, tag = 'internal scratch']
  #allocation2 [shape = 'f32[8,128]{1,0:T(8,128)}', space=vmem, size = 0x1000, scoped, tag = 'scratch operand']
  %s0 = inlined_call_operand.hbm [shape: f32[16,128], index: 0, kind: input, shape index: {}]
  %s1 = inlined_call_operand.hbm [shape: f32[128,128], index: 1, kind: input, shape index: {}]
  %s2 = inlined_call_operand.vmem [shape: f32[1,128], index: 2, kind: input, shape index: {}]
  %s3 = inlined_call_operand.hbm [shape: f32[128,128], index: 3, kind: input, shape index: {}]
  %s4 = inlined_call_operand.vmem [shape: f32[1,128], index: 4, kind: input, shape index: {}]
  %s5 = inlined_call_operand.vmem [shape: f32[1,128], index: 5, kind: input, shape index: {}]
  %s6 = inlined_call_operand.vmem [shape: f32[1,128], index: 6, kind: input, shape index: {}]
  %s7 = inlined_call_operand.hbm [shape: f32[16,128], index: 7, kind: output, shape index: {}]
  %s8 = sld [smem:[#allocation0]]
  $region81: #{tpu_custom_call.1} parent=0
    _
  %s10 = ssub.s32 1, %s8
  %s11 = scalar_select 0, %s10, %s8
  $region1: #{tpu_custom_call.1} parent=0
    #allocation3 [shape = 'u8[8192]{0}', space=vmem, size = 0x2000, scoped, tag = 'input window, operand 0']
    #allocation4 [shape = 's32[2]{0}', space=sflag, size = 0x8, scoped, tag = 'scoped memory for tpu_custom_call.1']
    #allocation5 [shape = 's32[2]{0}', space=sflag, size = 0x8, scoped, tag = 'scoped memory for tpu_custom_call.1']
    #allocation6 [shape = 'u8[65536]{0}', space=vmem, size = 0x10000, scoped, tag = 'input window, operand 1, single buffered']
    #allocation7 [shape = 's32[1]{0}', space=sflag, size = 0x4, scoped, tag = 'scoped memory for tpu_custom_call.1']
    #allocation8 [shape = 'u8[65536]{0}', space=vmem, size = 0x10000, scoped, tag = 'input window, operand 3, single buffered']
    #allocation9 [shape = 'u8[8192]{0}', space=vmem, size = 0x2000, scoped, tag = 'output window, operand 0']
    %12 = vsyncpa [#allocation4], 0
    %s13 = scalar_lea.sflag [#allocation4], 1
    %14 = vsyncpa %s13, 0
    %15 = vsyncpa [#allocation7], 0
    %16 = vsyncpa [#allocation5], 0
    %s17 = scalar_lea.sflag [#allocation5], 1
    %18 = vsyncpa %s17, 0
    loop: start=0, step=1, limit=4
    $region2: #{tpu_custom_call.1} parent=1 // loop_pre_header
      _
    $region3: #{tpu_custom_call.1} parent=1 // loop_header
      %s20 = sphi 0, %s24
      %p21 = scmp.ge.s32.totalorder %s20, 4
      %s27 = sphi 0, %s39
      %s28 = sphi 0, %s35
      %s29 = sphi 0, %s27
      %s30 = sphi 0, %s28
      %s31 = sphi 0, %s29
      %s32 = sphi 0, %s30
      %s42 = sphi 0, %s44
      %s45 = sphi 0, %s42
      %s46 = sphi 0, %s45
      %s62 = sphi 0, %s46
      %s68 = sphi 0, %s70
      %s71 = sphi 0, %s68
      %s72 = sphi 0, %s71
      %s88 = sphi 0, %s72
      %s94 = sphi 0, %s96
      %s97 = sphi 0, %s94
      %s98 = sphi 0, %s97
      %s114 = sphi 0, %s98
      %s120 = sphi 0, %s122
      %s123 = sphi 0, %s120
      %s124 = sphi 0, %s123
      %s140 = sphi 0, %s124
      %s144 = sphi 0, %s144
      %s146 = sphi 0, %s144
      %s147 = sphi 0, %s146
      %s161 = sphi 0, %s147
      %s165 = sphi 0, %s165
      %s167 = sphi 0, %s165
      %s168 = sphi 0, %s167
      %s182 = sphi 0, %s168
      %s186 = sphi 0, %s186
      %s188 = sphi 0, %s186
      %s189 = sphi 0, %s188
      %s203 = sphi 0, %s189
      %s209 = sphi 0, %s211
      %s212 = sphi 0, %s209
      %s213 = sphi 0, %s212
      %s229 = sphi 0, %s213
    $region4: #{tpu_custom_call.1} parent=1 // loop_header_branch
      %23 = sbr.rel (%p21) target = $region8
    $region5: #{tpu_custom_call.1} parent=1 // loop_body
      %s25 = ssub.s32 %s20, 1
      %s26 = ssub.s32 %s20, 2
      %s33 = sadd.s32 1, %s28
      %p34 = scmp.ge.s32.totalorder %s33, 1
      %s35 = scalar_select %p34, 0, %s33
      %s36 = sadd.s32 1, %s27
      %s37 = scalar_select %p34, %s36, %s27
      %p38 = scmp.ge.s32.totalorder %s37, 2
      %s39 = scalar_select %p38, 0, %s37
      %s40 = ssub.s32 %s27, %s39
      %p41 = scmp.eq.s32.totalorder %s40, 0
      %s43 = sadd.s32 %s42, 1
      %s44 = scalar_select %p41, %s42, %s43
      %p47 = pneg %p41
      %p48 = scmp.eq.s32.totalorder %s20, 1
      %p49 = por %p47, %p48
      %p50 = scmp.ne.s32.totalorder %s42, %s45
      %p51 = scmp.eq.s32.totalorder %s20, 0
      %p52 = por %p50, %p51
      %p53 = scmp.ne.s32.totalorder %s42, %s45
      %p54 = scmp.eq.s32.totalorder %s25, 1
      %p55 = por %p53, %p54
      %p56 = scmp.ne.s32.totalorder %s45, %s46
      %p57 = scmp.eq.s32.totalorder %s25, 0
      %p58 = por %p56, %p57
      %p59 = scmp.ne.s32.totalorder %s45, %s46
      %p60 = scmp.eq.s32.totalorder %s26, 1
      %p61 = por %p59, %p60
      %p63 = scmp.ne.s32.totalorder %s46, %s62
      %p64 = scmp.eq.s32.totalorder %s26, 0
      %p65 = por %p63, %p64
      %s66 = ssub.s32 %s28, %s35
      %p67 = scmp.eq.s32.totalorder %s66, 0
      %s69 = sadd.s32 %s68, 1
      %s70 = scalar_select %p67, %s68, %s69
      %p73 = pneg %p67
      %p74 = scmp.eq.s32.totalorder %s20, 1
      %p75 = por %p73, %p74
      %p76 = scmp.ne.s32.totalorder %s68, %s71
      %p77 = scmp.eq.s32.totalorder %s20, 0
      %p78 = por %p76, %p77
      %p79 = scmp.ne.s32.totalorder %s68, %s71
      %p80 = scmp.eq.s32.totalorder %s25, 1
      %p81 = por %p79, %p80
      %p82 = scmp.ne.s32.totalorder %s71, %s72
      %p83 = scmp.eq.s32.totalorder %s25, 0
      %p84 = por %p82, %p83
      %p85 = scmp.ne.s32.totalorder %s71, %s72
      %p86 = scmp.eq.s32.totalorder %s26, 1
      %p87 = por %p85, %p86
      %p89 = scmp.ne.s32.totalorder %s72, %s88
      %p90 = scmp.eq.s32.totalorder %s26, 0
      %p91 = por %p89, %p90
      %s92 = ssub.s32 %s28, %s35
      %p93 = scmp.eq.s32.totalorder %s92, 0
      %s95 = sadd.s32 %s94, 1
      %s96 = scalar_select %p93, %s94, %s95
      %p99 = pneg %p93
      %p100 = scmp.eq.s32.totalorder %s20, 1
      %p101 = por %p99, %p100
      %p102 = scmp.ne.s32.totalorder %s94, %s97
      %p103 = scmp.eq.s32.totalorder %s20, 0
      %p104 = por %p102, %p103
      %p105 = scmp.ne.s32.totalorder %s94, %s97
      %p106 = scmp.eq.s32.totalorder %s25, 1
      %p107 = por %p105, %p106
      %p108 = scmp.ne.s32.totalorder %s97, %s98
      %p109 = scmp.eq.s32.totalorder %s25, 0
      %p110 = por %p108, %p109
      %p111 = scmp.ne.s32.totalorder %s97, %s98
      %p112 = scmp.eq.s32.totalorder %s26, 1
      %p113 = por %p111, %p112
      %p115 = scmp.ne.s32.totalorder %s98, %s114
      %p116 = scmp.eq.s32.totalorder %s26, 0
      %p117 = por %p115, %p116
      %s118 = ssub.s32 %s28, %s35
      %p119 = scmp.eq.s32.totalorder %s118, 0
      %s121 = sadd.s32 %s120, 1
      %s122 = scalar_select %p119, %s120, %s121
      %p125 = pneg %p119
      %p126 = scmp.eq.s32.totalorder %s20, 1
      %p127 = por %p125, %p126
      %p128 = scmp.ne.s32.totalorder %s120, %s123
      %p129 = scmp.eq.s32.totalorder %s20, 0
      %p130 = por %p128, %p129
      %p131 = scmp.ne.s32.totalorder %s120, %s123
      %p132 = scmp.eq.s32.totalorder %s25, 1
      %p133 = por %p131, %p132
      %p134 = scmp.ne.s32.totalorder %s123, %s124
      %p135 = scmp.eq.s32.totalorder %s25, 0
      %p136 = por %p134, %p135
      %p137 = scmp.ne.s32.totalorder %s123, %s124
      %p138 = scmp.eq.s32.totalorder %s26, 1
      %p139 = por %p137, %p138
      %p141 = scmp.ne.s32.totalorder %s124, %s140
      %p142 = scmp.eq.s32.totalorder %s26, 0
      %p143 = por %p141, %p142
      %s145 = sadd.s32 %s144, 1
      %p148 = scmp.eq.s32.totalorder %s20, 1
      %p149 = scmp.ne.s32.totalorder %s144, %s146
      %p150 = scmp.eq.s32.totalorder %s20, 0
      %p151 = por %p149, %p150
      %p152 = scmp.ne.s32.totalorder %s144, %s146
      %p153 = scmp.eq.s32.totalorder %s25, 1
      %p154 = por %p152, %p153
      %p155 = scmp.ne.s32.totalorder %s146, %s147
      %p156 = scmp.eq.s32.totalorder %s25, 0
      %p157 = por %p155, %p156
      %p158 = scmp.ne.s32.totalorder %s146, %s147
      %p159 = scmp.eq.s32.totalorder %s26, 1
      %p160 = por %p158, %p159
      %p162 = scmp.ne.s32.totalorder %s147, %s161
      %p163 = scmp.eq.s32.totalorder %s26, 0
      %p164 = por %p162, %p163
      %s166 = sadd.s32 %s165, 1
      %p169 = scmp.eq.s32.totalorder %s20, 1
      %p170 = scmp.ne.s32.totalorder %s165, %s167
      %p171 = scmp.eq.s32.totalorder %s20, 0
      %p172 = por %p170, %p171
      %p173 = scmp.ne.s32.totalorder %s165, %s167
      %p174 = scmp.eq.s32.totalorder %s25, 1
      %p175 = por %p173, %p174
      %p176 = scmp.ne.s32.totalorder %s167, %s168
      %p177 = scmp.eq.s32.totalorder %s25, 0
      %p178 = por %p176, %p177
      %p179 = scmp.ne.s32.totalorder %s167, %s168
      %p180 = scmp.eq.s32.totalorder %s26, 1
      %p181 = por %p179, %p180
      %p183 = scmp.ne.s32.totalorder %s168, %s182
      %p184 = scmp.eq.s32.totalorder %s26, 0
      %p185 = por %p183, %p184
      %s187 = sadd.s32 %s186, 1
      %p190 = scmp.eq.s32.totalorder %s20, 1
      %p191 = scmp.ne.s32.totalorder %s186, %s188
      %p192 = scmp.eq.s32.totalorder %s20, 0
      %p193 = por %p191, %p192
      %p194 = scmp.ne.s32.totalorder %s186, %s188
      %p195 = scmp.eq.s32.totalorder %s25, 1
      %p196 = por %p194, %p195
      %p197 = scmp.ne.s32.totalorder %s188, %s189
      %p198 = scmp.eq.s32.totalorder %s25, 0
      %p199 = por %p197, %p198
      %p200 = scmp.ne.s32.totalorder %s188, %s189
      %p201 = scmp.eq.s32.totalorder %s26, 1
      %p202 = por %p200, %p201
      %p204 = scmp.ne.s32.totalorder %s189, %s203
      %p205 = scmp.eq.s32.totalorder %s26, 0
      %p206 = por %p204, %p205
      %s207 = ssub.s32 %s27, %s39
      %p208 = scmp.eq.s32.totalorder %s207, 0
      %s210 = sadd.s32 %s209, 1
      %s211 = scalar_select %p208, %s209, %s210
      %p214 = pneg %p208
      %p215 = scmp.eq.s32.totalorder %s20, 1
      %p216 = por %p214, %p215
      %p217 = scmp.ne.s32.totalorder %s209, %s212
      %p218 = scmp.eq.s32.totalorder %s20, 0
      %p219 = por %p217, %p218
      %p220 = scmp.ne.s32.totalorder %s209, %s212
      %p221 = scmp.eq.s32.totalorder %s25, 1
      %p222 = por %p220, %p221
      %p223 = scmp.ne.s32.totalorder %s212, %s213
      %p224 = scmp.eq.s32.totalorder %s25, 0
      %p225 = por %p223, %p224
      %p226 = scmp.ne.s32.totalorder %s212, %s213
      %p227 = scmp.eq.s32.totalorder %s26, 1
      %p228 = por %p226, %p227
      %p230 = scmp.ne.s32.totalorder %s213, %s229
      %p231 = scmp.eq.s32.totalorder %s26, 0
      %p232 = por %p230, %p231
      %p233 = scmp.le.s32.totalorder 1, %s20
      %p234 = scmp.lt.s32.totalorder %s20, 3
      %p235 = pnand %p233, %p234
      %p236 = pneg %p235
      // Predicated region
      $region9: #{tpu_custom_call.1} parent=5 // pred_check
        _
      $region10: #{tpu_custom_call.1} parent=5 // pred_check_branch
        %238 = sbr.rel (%p235) target = $region12
      $region11: #{tpu_custom_call.1} parent=5 // pred_region
        %s239 = ssub.s32 %s20, 1
        // Predicated region
        $region13: #{tpu_custom_call.1} parent=11 // pred_check
          %p240 = pneg %p84
        $region14: #{tpu_custom_call.1} parent=11 // pred_check_branch
          %242 = sbr.rel (%p240) target = $region16
        $region15: #{tpu_custom_call.1} parent=11 // pred_region
          %244 = vsyncadd [#allocation7], 0
          %s245 = smul.addr %s30, 8
          %s246 = scalar_lea.hbm %s1, %s245
          %s247 = sshll.u32 %s246, 4
          %s248 = int_to_ptr.hbm [resolvable:$true] %s247
          %s249 = sshll.u32 [#allocation6], 4
          %s250 = int_to_ptr.vmem [resolvable:$true] %s249
          %255 = dma.hbm_to_vmem [thread:$0]  %s248, 2048, %s250, [#allocation7], 128, 128, 8
        $region16: #{tpu_custom_call.1} parent=11 // pred_fallthru
          _
        // Predicated region
        $region17: #{tpu_custom_call.1} parent=11 // pred_check
          %p256 = pneg %p110
        $region18: #{tpu_custom_call.1} parent=11 // pred_check_branch
          %258 = sbr.rel (%p256) target = $region20
        $region19: #{tpu_custom_call.1} parent=11 // pred_region
          %p259 = scmp.lt.s32.totalorder %s30, 0
          %s260 = scalar_select %p259, %s30, 0
          %s261 = scalar_lea.vmem %s2, %s260
        $region20: #{tpu_custom_call.1} parent=11 // pred_fallthru
          _
        // Predicated region
        $region21: #{tpu_custom_call.1} parent=11 // pred_check
          %p262 = pneg %p136
        $region22: #{tpu_custom_call.1} parent=11 // pred_check_branch
          %264 = sbr.rel (%p262) target = $region24
        $region23: #{tpu_custom_call.1} parent=11 // pred_region
          %s265 = smul.u32 16, %s30
          %267 = vsyncadd [#allocation7], 0
          %s268 = smul.addr %s265, 8
          %s269 = scalar_lea.hbm %s3, %s268
          %s270 = sshll.u32 %s269, 4
          %s271 = int_to_ptr.hbm [resolvable:$true] %s270
          %s272 = sshll.u32 [#allocation8], 4
          %s273 = int_to_ptr.vmem [resolvable:$true] %s272
          %278 = dma.hbm_to_vmem [thread:$0]  %s271, 2048, %s273, [#allocation7], 128, 128, 8
        $region24: #{tpu_custom_call.1} parent=11 // pred_fallthru
          _
        // Predicated region
        $region25: #{tpu_custom_call.1} parent=11 // pred_check
          %p279 = pneg %p157
        $region26: #{tpu_custom_call.1} parent=11 // pred_check_branch
          %281 = sbr.rel (%p279) target = $region28
        $region27: #{tpu_custom_call.1} parent=11 // pred_region
          _
        $region28: #{tpu_custom_call.1} parent=11 // pred_fallthru
          _
        // Predicated region
        $region29: #{tpu_custom_call.1} parent=11 // pred_check
          %p282 = pneg %p178
        $region30: #{tpu_custom_call.1} parent=11 // pred_check_branch
          %284 = sbr.rel (%p282) target = $region32
        $region31: #{tpu_custom_call.1} parent=11 // pred_region
          _
        $region32: #{tpu_custom_call.1} parent=11 // pred_fallthru
          _
        // Predicated region
        $region33: #{tpu_custom_call.1} parent=11 // pred_check
          %p285 = pneg %p199
        $region34: #{tpu_custom_call.1} parent=11 // pred_check_branch
          %287 = sbr.rel (%p285) target = $region36
        $region35: #{tpu_custom_call.1} parent=11 // pred_region
          _
        $region36: #{tpu_custom_call.1} parent=11 // pred_fallthru
          _
      $region12: #{tpu_custom_call.1} parent=5 // pred_fallthru
        _
      %p288 = scmp.lt.s32.totalorder %s20, 2
      // Predicated region
      $region37: #{tpu_custom_call.1} parent=5 // pred_check
        %p289 = pneg %p288
      $region38: #{tpu_custom_call.1} parent=5 // pred_check_branch
        %291 = sbr.rel (%p289) target = $region40
      $region39: #{tpu_custom_call.1} parent=5 // pred_region
        // Predicated region
        $region41: #{tpu_custom_call.1} parent=39 // pred_check
          %p292 = pneg %p52
        $region42: #{tpu_custom_call.1} parent=39 // pred_check_branch
          %294 = sbr.rel (%p292) target = $region44
        $region43: #{tpu_custom_call.1} parent=39 // pred_region
          %s295 = sand.u32 %s42, 1
          %s296 = scalar_lea.sflag [#allocation4], %s295
          %s297 = sand.u32 %s42, 1
          %s298 = smul.addr %s297, 8
          %s299 = scalar_lea.vmem [#allocation3], %s298
          %301 = vsyncadd %s296, 0
          %s302 = smul.addr %s27, 8
          %s303 = scalar_lea.hbm %s0, %s302
          %s305 = sshll.u32 %s303, 4
          %s306 = int_to_ptr.hbm [resolvable:$true] %s305
          %s307 = sshll.u32 %s299, 4
          %s308 = int_to_ptr.vmem [resolvable:$true] %s307
          %310 = dma.hbm_to_vmem [thread:$0]  %s306, 128, %s308, %s296
        $region44: #{tpu_custom_call.1} parent=39 // pred_fallthru
          _
      $region40: #{tpu_custom_call.1} parent=5 // pred_fallthru
        _
      %p311 = scmp.le.s32.totalorder 1, %s20
      %p312 = scmp.lt.s32.totalorder %s20, 3
      %p313 = pnand %p311, %p312
      %p314 = pneg %p313
      // Predicated region
      $region45: #{tpu_custom_call.1} parent=5 // pred_check
        _
      $region46: #{tpu_custom_call.1} parent=5 // pred_check_branch
        %316 = sbr.rel (%p313) target = $region48
      $region47: #{tpu_custom_call.1} parent=5 // pred_region
        %s317 = ssub.s32 %s20, 1
        %s318 = sand.u32 %s45, 1
        %s319 = scalar_lea.sflag [#allocation4], %s318
        %s320 = sand.u32 %s45, 1
        %s321 = smul.addr %s320, 8
        %s322 = scalar_lea.vmem [#allocation3], %s321
        // Predicated region
        $region49: #{tpu_custom_call.1} parent=47 // pred_check
          %p323 = pneg %p58
        $region50: #{tpu_custom_call.1} parent=47 // pred_check_branch
          %325 = sbr.rel (%p323) target = $region52
        $region51: #{tpu_custom_call.1} parent=47 // pred_region
          %327 = dma.done %s319, 128
        $region52: #{tpu_custom_call.1} parent=47 // pred_fallthru
          _
        // Predicated region
        $region53: #{tpu_custom_call.1} parent=47 // pred_check
          %p328 = pneg %p84
        $region54: #{tpu_custom_call.1} parent=47 // pred_check_branch
          %330 = sbr.rel (%p328) target = $region56
        $region55: #{tpu_custom_call.1} parent=47 // pred_region
          %332 = dma.done [#allocation7], 2048
        $region56: #{tpu_custom_call.1} parent=47 // pred_fallthru
          _
        // Predicated region
        $region57: #{tpu_custom_call.1} parent=47 // pred_check
          %p333 = pneg %p136
        $region58: #{tpu_custom_call.1} parent=47 // pred_check_branch
          %335 = sbr.rel (%p333) target = $region60
        $region59: #{tpu_custom_call.1} parent=47 // pred_region
          %337 = dma.done [#allocation7], 2048
        $region60: #{tpu_custom_call.1} parent=47 // pred_fallthru
          _
        %s338 = sand.u32 %s45, 1
        %s339 = scalar_lea.sflag [#allocation4], %s338
        %s340 = sand.u32 %s45, 1
        %s341 = smul.addr %s340, 8
        %s342 = scalar_lea.vmem [#allocation3], %s341
        %p343 = pneg %p58
        %p344 = pneg %p55
        %p345 = pneg %p84
        %p346 = pneg %p81
        %p347 = scmp.lt.s32.totalorder %s30, 0
        %s348 = scalar_select %p347, %s30, 0
        %s349 = scalar_lea.vmem %s2, %s348
        %p350 = pneg %p110
        %p351 = pneg %p107
        %p352 = pneg %p136
        %p353 = pneg %p133
        %p354 = pneg %p157
        %p355 = pneg %p154
        %p356 = pneg %p178
        %p357 = pneg %p175
        %p358 = pneg %p199
        %p359 = pneg %p196
        %p360 = pneg %p225
        %p361 = pneg %p222
        %s362 = sand.u32 %s212, 1
        %s363 = scalar_lea.sflag [#allocation5], %s362
        %s364 = sand.u32 %s212, 1
        %s365 = smul.addr %s364, 8
        %s366 = scalar_lea.vmem [#allocation9], %s365
        %p367 = scmp.lt.s32.totalorder %s30, 0
        %s368 = scalar_select %p367, %s30, 0
        %s369 = scalar_lea.vmem %s2, %s368
        %s370 = smul.u32 16, %s30
        %p371 = scmp.eq.s32.totalorder %s30, 0
        // Predicated region
        $region61: #{tpu_custom_call.1} parent=47 // pred_check
          %p372 = pneg %p371
        $region62: #{tpu_custom_call.1} parent=47 // pred_check_branch
          %374 = sbr.rel (%p372) target = $region64
        $region63: #{tpu_custom_call.1} parent=47 // pred_region
          %v375 = vld [vmem:[%s322] sm:$0xff]
          %v376 = vld [vmem:[%s4] sm:$0x1]
          %v378 = vperm.slane %v376, 0
          %v380 = vadd.f32 %v375, %v378
          %381 = vst [vmem:[#allocation2] sm:$0xff] %v380
        $region64: #{tpu_custom_call.1} parent=47 // pred_fallthru
          _
        %v382 = vld [vmem:[%s322] sm:$0xff]
        %v383 = vld [vmem:[#allocation6] sm:$0xff]
        %v384 = vld [vmem:[#allocation6 + $0x8] sm:$0xff]
        %v385 = vld [vmem:[#allocation6 + $0x10] sm:$0xff]
        %v386 = vld [vmem:[#allocation6 + $0x18] sm:$0xff]
        %v387 = vld [vmem:[#allocation6 + $0x20] sm:$0xff]
        %v388 = vld [vmem:[#allocation6 + $0x28] sm:$0xff]
        %v389 = vld [vmem:[#allocation6 + $0x30] sm:$0xff]
        %v390 = vld [vmem:[#allocation6 + $0x38] sm:$0xff]
        %v391 = vld [vmem:[#allocation6 + $0x40] sm:$0xff]
        %v392 = vld [vmem:[#allocation6 + $0x48] sm:$0xff]
        %v393 = vld [vmem:[#allocation6 + $0x50] sm:$0xff]
        %v394 = vld [vmem:[#allocation6 + $0x58] sm:$0xff]
        %v395 = vld [vmem:[#allocation6 + $0x60] sm:$0xff]
        %v396 = vld [vmem:[#allocation6 + $0x68] sm:$0xff]
        %v397 = vld [vmem:[#allocation6 + $0x70] sm:$0xff]
        %v398 = vld [vmem:[#allocation6 + $0x78] sm:$0xff]
        %v399 = vld [vmem:[#allocation8] sm:$0xff]
        %v400 = vld [vmem:[#allocation8 + $0x8] sm:$0xff]
        %v401 = vld [vmem:[#allocation8 + $0x10] sm:$0xff]
        %v402 = vld [vmem:[#allocation8 + $0x18] sm:$0xff]
        %v403 = vld [vmem:[#allocation8 + $0x20] sm:$0xff]
        %v404 = vld [vmem:[#allocation8 + $0x28] sm:$0xff]
        %v405 = vld [vmem:[#allocation8 + $0x30] sm:$0xff]
        %v406 = vld [vmem:[#allocation8 + $0x38] sm:$0xff]
        %v407 = vld [vmem:[#allocation8 + $0x40] sm:$0xff]
        %v408 = vld [vmem:[#allocation8 + $0x48] sm:$0xff]
        %v409 = vld [vmem:[#allocation8 + $0x50] sm:$0xff]
        %v410 = vld [vmem:[#allocation8 + $0x58] sm:$0xff]
        %v411 = vld [vmem:[#allocation8 + $0x60] sm:$0xff]
        %v412 = vld [vmem:[#allocation8 + $0x68] sm:$0xff]
        %v413 = vld [vmem:[#allocation8 + $0x70] sm:$0xff]
        %v414 = vld [vmem:[#allocation8 + $0x78] sm:$0xff]
        %v415 = vld [vmem:[%s369] sm:$0x1]
        %v417 = vperm.slane %v415, 0
        %419 = vmatpush.msra.mxu0 %v398
        %420 = vmatpush.msra.mxu0 %v397
        %421 = vmatpush.msra.mxu0 %v396
        %422 = vmatpush.msra.mxu0 %v395
        %423 = vmatpush.msra.mxu0 %v394
        %424 = vmatpush.msra.mxu0 %v393
        %425 = vmatpush.msra.mxu0 %v392
        %426 = vmatpush.msra.mxu0 %v391
        %427 = vmatpush.msra.mxu0 %v390
        %428 = vmatpush.msra.mxu0 %v389
        %429 = vmatpush.msra.mxu0 %v388
        %430 = vmatpush.msra.mxu0 %v387
        %431 = vmatpush.msra.mxu0 %v386
        %432 = vmatpush.msra.mxu0 %v385
        %433 = vmatpush.msra.mxu0 %v384
        %434 = vmatpush.msra.mxu0 %v383
        %435 = vmatmul.f32.gmra.mxu0 %v382
        %v436 = vpop.f32.mrf.mxu0
        %v437 = vadd.f32 %v417, %v436
        %438 = vdwg.mxu0
        %v439 = vmax.f32 %v437, 0.0
        %v440 = vld [vmem:[#allocation2] sm:$0xff]
        %441 = vmatpush.msra.mxu0 %v414
        %442 = vmatpush.msra.mxu0 %v413
        %443 = vmatpush.msra.mxu0 %v412
        %444 = vmatpush.msra.mxu0 %v411
        %445 = vmatpush.msra.mxu0 %v410
        %446 = vmatpush.msra.mxu0 %v409
        %447 = vmatpush.msra.mxu0 %v408
        %448 = vmatpush.msra.mxu0 %v407
        %449 = vmatpush.msra.mxu0 %v406
        %450 = vmatpush.msra.mxu0 %v405
        %451 = vmatpush.msra.mxu0 %v404
        %452 = vmatpush.msra.mxu0 %v403
        %453 = vmatpush.msra.mxu0 %v402
        %454 = vmatpush.msra.mxu0 %v401
        %455 = vmatpush.msra.mxu0 %v400
        %456 = vmatpush.msra.mxu0 %v399
        %457 = vmatmul.f32.gmra.mxu0 %v439
        %v458 = vpop.f32.mrf.mxu0
        %v459 = vadd.f32 0.0, %v458
        %460 = vdwg.mxu0
        %v461 = vadd.f32 %v440, %v459
        %462 = vst [vmem:[#allocation2] sm:$0xff] %v461
        // Predicated region
        $region65: #{tpu_custom_call.1} parent=47 // pred_check
          %p463 = pneg %p371
        $region66: #{tpu_custom_call.1} parent=47 // pred_check_branch
          %465 = sbr.rel (%p463) target = $region68
        $region67: #{tpu_custom_call.1} parent=47 // pred_region
          %v466 = vld [vmem:[#allocation2] sm:$0xff]
          %v467 = vlaneseq
          %v468 = vand.u32 %v467, 127
          %vm469 = vcmp.lt.s32.totalorder %v468, 32
          %v470 = vsel %vm469, 1, 0
          %v471 = vcvt.s32.f32 %v470
          %472 = vadd.xlane.f32.xlu0 %v466
          %v473 = vpop.xlane.xlu0 %472
          %v474 = vmul.f32 %v473, 0.03125
          %v475 = vsub.f32 %v466, %v474
          %v476 = vmul.f32 %v475, %v471
          %v477 = vmul.f32 %v476, %v476
          %478 = vadd.xlane.f32.xlu0 %v477
          %v479 = vpop.xlane.xlu0 %478
          %v480 = vmul.f32 %v479, 0.03125
          %v481 = vadd.f32 %v480, 1e-06
          %v482 = vrsqrt.pop %v481
          %v483 = vmul.f32 %v482, %v481
          %v484 = vmul.f32 %v483, %v482
          %v485 = vmul.f32 0.5, %v484
          %v486 = vsub.f32 1.5, %v485
          %v487 = vmul.f32 %v482, %v486
          %vm488 = vweird.f32 %v481
          %vm489 = vweird.f32 %v482
          %vm490 = vmor %vm488, %vm489
          %v491 = vsel %vm490, %v482, %v487
          %v492 = vmul.f32 %v476, %v491
          %v493 = vld [vmem:[%s5] sm:$0x1]
          %v495 = vperm.slane %v493, 0
          %v497 = vmul.f32 %v492, %v495
          %v498 = vld [vmem:[%s6] sm:$0x1]
          %v500 = vperm.slane %v498, 0
          %v502 = vadd.f32 %v497, %v500
          %503 = vst [vmem:[%s366] sm:$0xff] %v502
        $region68: #{tpu_custom_call.1} parent=47 // pred_fallthru
          _
        %s504 = sand.u32 %s212, 1
        %s505 = scalar_lea.sflag [#allocation5], %s504
        %s506 = sand.u32 %s212, 1
        %s507 = smul.addr %s506, 8
        %s508 = scalar_lea.vmem [#allocation9], %s507
        // Predicated region
        $region69: #{tpu_custom_call.1} parent=47 // pred_check
          %p509 = pneg %p222
        $region70: #{tpu_custom_call.1} parent=47 // pred_check_branch
          %511 = sbr.rel (%p509) target = $region72
        $region71: #{tpu_custom_call.1} parent=47 // pred_region
          %513 = vsyncadd %s505, 0
          %s514 = smul.addr %s29, 8
          %s515 = scalar_lea.hbm %s7, %s514
          %s517 = sshll.u32 %s508, 4
          %s518 = int_to_ptr.vmem [resolvable:$true] %s517
          %s519 = sshll.u32 %s515, 4
          %s520 = int_to_ptr.hbm [resolvable:$true] %s519
          %522 = dma.vmem_to_hbm [thread:$0]  %s518, 128, %s520, %s505
        $region72: #{tpu_custom_call.1} parent=47 // pred_fallthru
          _
      $region48: #{tpu_custom_call.1} parent=5 // pred_fallthru
        _
      %p523 = scmp.le.s32.totalorder 2, %s20
      // Predicated region
      $region73: #{tpu_custom_call.1} parent=5 // pred_check
        %p524 = pneg %p523
      $region74: #{tpu_custom_call.1} parent=5 // pred_check_branch
        %526 = sbr.rel (%p524) target = $region76
      $region75: #{tpu_custom_call.1} parent=5 // pred_region
        %s527 = ssub.s32 %s20, 2
        // Predicated region
        $region77: #{tpu_custom_call.1} parent=75 // pred_check
          %p528 = pneg %p228
        $region78: #{tpu_custom_call.1} parent=75 // pred_check_branch
          %530 = sbr.rel (%p528) target = $region80
        $region79: #{tpu_custom_call.1} parent=75 // pred_region
          %s531 = sand.u32 %s213, 1
          %s532 = scalar_lea.sflag [#allocation5], %s531
          %s533 = sand.u32 %s213, 1
          %s534 = smul.addr %s533, 8
          %s535 = scalar_lea.vmem [#allocation9], %s534
          %537 = dma.done %s532, 128
        $region80: #{tpu_custom_call.1} parent=75 // pred_fallthru
          _
      $region76: #{tpu_custom_call.1} parent=5 // pred_fallthru
        _
    $region6: #{tpu_custom_call.1} parent=1 // loop_footer
      %s24 = sadd.s32 1, %s20
    $region7: #{tpu_custom_call.1} parent=1 // loop_footer_branch
      %19 = sbr.rel target = $region3
    $region8: #{tpu_custom_call.1} parent=1 // loop_exit
      _
    %538 = vsyncpa [#allocation4], 1
    %s539 = scalar_lea.sflag [#allocation4], 1
    %540 = vsyncpa %s539, 1
    %541 = vsyncpa [#allocation7], 1
    %542 = vsyncpa [#allocation5], 1
    %s543 = scalar_lea.sflag [#allocation5], 1
    %544 = vsyncpa %s543, 1

</llo_original>
